<compile_context>
chip_gen: v5e
topology: v5e:2x2
jax: 0.10.0
libtpu: 0.0.40
codegen_flags: <defaults>
</compile_context>

<pallas_src>
import functools
import math

import jax
import jax.numpy as jnp
from jax.experimental import pallas as pl
from jax.experimental.pallas import tpu as pltpu


# ----------------------------------------------------------------------------
# Kernel bodies
# ----------------------------------------------------------------------------
def _mm_bn_relu6_kernel(x_ref, w_ref, s_ref, b_ref, o_ref):
    """One batch element: relu6((HW, K) @ (K, C) * scale + bias)."""
    y = jnp.dot(x_ref[0], w_ref[...], preferred_element_type=jnp.float32)
    o_ref[0] = jnp.clip(y * s_ref[...] + b_ref[...], 0.0, 6.0)


def _head_kernel(x_ref, lw_ref, ls_ref, lb_ref, cw_ref, cb_ref, o_ref):
    """Fused last ConvBNReLU(1x1) + AdaptiveAvgPool2d((1,1)) + Linear."""
    x = x_ref[0]                                                # (HW, Cin)
    y = jnp.dot(x, lw_ref[...], preferred_element_type=jnp.float32)
    y = jnp.clip(y * ls_ref[...] + lb_ref[...], 0.0, 6.0)       # (HW, Clast)
    pooled = jnp.mean(y, axis=0, keepdims=True)                 # (1, Clast)
    # Dropout(0.2) is identity in eval mode.
    logits = jnp.dot(pooled, cw_ref[...],
                     preferred_element_type=jnp.float32) + cb_ref[...]
    o_ref[0] = logits                                           # (1, classes)


def _block_kernel(*refs, H, W, stride, has_expand, use_shortcut):
    """Fused InvertedResidual for one batch element.

    expand 1x1 (+BN+ReLU6) -> depthwise 3x3 (+BN+ReLU6) -> project 1x1 (+BN)
    [+ residual].  The expanded activation never leaves VMEM.  For stride==2
    the wrapper pre-orders each input row as [odd cols..., even cols...] so the
    padded hidden activation is scattered into a parity-split scratch and each
    depthwise tap (computed directly at the strided output resolution) is a
    unit-stride slice.
    """
    if has_expand:
        (x_ref, ew_ref, es_ref, eb_ref, dw_ref, ds_ref, db_ref,
         pw_ref, ps_ref, pb_ref, o_ref, hp_ref, h2_ref) = refs
    else:
        (x_ref, dw_ref, ds_ref, db_ref,
         pw_ref, ps_ref, pb_ref, o_ref, hp_ref, h2_ref) = refs

    Ho, Wo = (H, W) if stride == 1 else (H // 2, W // 2)
    hidden = dw_ref.shape[1]
    x2d = x_ref[0]                                              # (H*W, Cin)

    # --- 1) expand 1x1 conv + BN + ReLU6 (one MXU matmul over all pixels) ---
    if has_expand:
        h = jnp.dot(x2d, ew_ref[...], preferred_element_type=jnp.float32)
        h = jnp.clip(h * es_ref[...] + eb_ref[...], 0.0, 6.0)   # (H*W, hidden)
    else:
        h = x2d

    # --- 2) scatter rows into the zero-padded VMEM scratch (in-kernel pad) ---
    hp_ref[...] = jnp.zeros(hp_ref.shape, jnp.float32)
    if stride == 1:
        for i in range(H):
            hp_ref[0, i + 1, 1:W + 1, :] = h[i * W:(i + 1) * W, :]
    else:
        for i in range(H):
            pr, qr = (i + 1) % 2, (i + 1) // 2
            # wrapper ordered each row as [odd columns (Wo), even columns (Wo)]
            hp_ref[2 * pr + 0, qr, 1:Wo + 1, :] = h[i * W:i * W + Wo, :]
            hp_ref[2 * pr + 1, qr, 0:Wo, :] = h[i * W + Wo:(i + 1) * W, :]

    # --- 3) depthwise 3x3 + BN + ReLU6, directly at strided output size ---
    acc = jnp.zeros((Ho, Wo, hidden), jnp.float32)
    for kh in range(3):
        for kw in range(3):
            if stride == 1:
                tap = hp_ref[0, kh:kh + Ho, kw:kw + Wo, :]
            else:
                par = 2 * (kh % 2) + (kw % 2)
                tap = hp_ref[par, kh // 2:kh // 2 + Ho, kw // 2:kw // 2 + Wo, :]
            acc = acc + tap * dw_ref[kh * 3 + kw]
    hdw = jnp.clip(acc * ds_ref[0] + db_ref[0], 0.0, 6.0)       # (Ho, Wo, hid)

    # --- 4) repack (Ho, Wo, hidden) -> (Ho*Wo, hidden) for the project matmul
    for r in range(Ho):
        h2_ref[r * Wo:(r + 1) * Wo, :] = hdw[r]

    # --- 5) project 1x1 conv + BN (+ residual) ---
    y = jnp.dot(h2_ref[...], pw_ref[...], preferred_element_type=jnp.float32)
    y = y * ps_ref[...] + pb_ref[...]
    if use_shortcut:
        y = y + x2d
    o_ref[0] = y


# ----------------------------------------------------------------------------
# Pallas wrappers
# ----------------------------------------------------------------------------
def _parallel_params():
    return pltpu.CompilerParams(dimension_semantics=("parallel",))


def stem_conv(x, p):
    """3x3 stride-2 ConvBNReLU stem: plain-JAX im2col + gridded Pallas matmul."""
    # TODO(synk): build the im2col patches in-kernel for large inputs; at these
    # shapes the 9x-expanded patch tensor of a 3-channel image is tiny.
    N, H, W, C = x.shape
    xp = jnp.pad(x, ((0, 0), (1, 1), (1, 1), (0, 0)))
    Ho = (H - 1) // 2 + 1
    Wo = (W - 1) // 2 + 1
    patches = []
    for kh in range(3):
        for kw in range(3):
            patches.append(xp[:, kh:kh + 2 * (Ho - 1) + 1:2,
                              kw:kw + 2 * (Wo - 1) + 1:2, :])
    pcat = jnp.concatenate(patches, axis=-1).reshape(N, Ho * Wo, 9 * C)
    w, s, b = p["w"], p["scale"], p["bias"]
    Cout = w.shape[1]
    out = pl.pallas_call(
        _mm_bn_relu6_kernel,
        out_shape=jax.ShapeDtypeStruct((N, Ho * Wo, Cout), jnp.float32),
        grid=(N,),
        in_specs=[pl.BlockSpec((1, Ho * Wo, 9 * C), lambda n: (n, 0, 0)),
                  pl.BlockSpec(w.shape, lambda n: (0, 0)),
                  pl.BlockSpec(s.shape, lambda n: (0, 0)),
                  pl.BlockSpec(b.shape, lambda n: (0, 0))],
        out_specs=pl.BlockSpec((1, Ho * Wo, Cout), lambda n: (n, 0, 0)),
        compiler_params=_parallel_params(),
    )(pcat, w, s, b)
    return out, Ho, Wo


def inverted_residual(x2, H, W, p):
    """One fused InvertedResidual block. x2: (N, H*W, Cin) row-major pixels."""
    N, HW, Cin = x2.shape
    stride = p["stride"]
    has_expand = p["expand"] is not None
    dw_w, dw_s, dw_b = p["dw"]
    pw, ps, pb = p["project"]
    hidden = dw_w.shape[1]
    Cout = pw.shape[1]

    if stride == 1:
        Ho, Wo = H, W
        hp_shape = (1, H + 2, W + 2, hidden)
    else:
        assert H % 2 == 0 and W % 2 == 0, "stride-2 blocks need even H, W"
        Ho, Wo = H // 2, W // 2
        hp_shape = (4, Ho + 1, Wo + 1, hidden)
        # Reorder each row's pixels to [odd cols..., even cols...] so the kernel
        # can scatter into the parity-split padded scratch with unit strides.
        x4 = x2.reshape(N, H, W, Cin)
        x2 = jnp.concatenate([x4[:, :, 1::2, :], x4[:, :, 0::2, :]],
                             axis=2).reshape(N, HW, Cin)

    args = [x2]
    in_specs = [pl.BlockSpec((1, HW, Cin), lambda n: (n, 0, 0))]
    if has_expand:
        ew, es, eb = p["expand"]
        args += [ew, es, eb]
        in_specs += [pl.BlockSpec(a.shape, lambda n: (0, 0))
                     for a in (ew, es, eb)]
    args += [dw_w, dw_s, dw_b, pw, ps, pb]
    in_specs += [pl.BlockSpec(a.shape, lambda n: (0, 0))
                 for a in (dw_w, dw_s, dw_b, pw, ps, pb)]

    kernel = functools.partial(
        _block_kernel, H=H, W=W, stride=stride,
        has_expand=has_expand, use_shortcut=p["use_shortcut"])

    out = pl.pallas_call(
        kernel,
        out_shape=jax.ShapeDtypeStruct((N, Ho * Wo, Cout), jnp.float32),
        grid=(N,),
        in_specs=in_specs,
        out_specs=pl.BlockSpec((1, Ho * Wo, Cout), lambda n: (n, 0, 0)),
        scratch_shapes=[pltpu.VMEM(hp_shape, jnp.float32),
                        pltpu.VMEM((Ho * Wo, hidden), jnp.float32)],
        compiler_params=_parallel_params(),
    )(*args)
    # TODO(synk): for large (e.g. 224x224) inputs, additionally tile the grid
    # over spatial row-strips (with a 1-row halo) so the per-step VMEM
    # footprint stays within v7x's 64 MiB.
    return out, Ho, Wo


def head_forward(x2, p):
    """Fused last ConvBNReLU(1x1) + global avg-pool + flatten + classifier."""
    N, HW, Cin = x2.shape
    w, s, b = p["w"], p["scale"], p["bias"]
    cw, cb = p["cw"], p["cb"]
    num_classes = cw.shape[1]
    out = pl.pallas_call(
        _head_kernel,
        out_shape=jax.ShapeDtypeStruct((N, 1, num_classes), jnp.float32),
        grid=(N,),
        in_specs=[pl.BlockSpec((1, HW, Cin), lambda n: (n, 0, 0)),
                  pl.BlockSpec(w.shape, lambda n: (0, 0)),
                  pl.BlockSpec(s.shape, lambda n: (0, 0)),
                  pl.BlockSpec(b.shape, lambda n: (0, 0)),
                  pl.BlockSpec(cw.shape, lambda n: (0, 0)),
                  pl.BlockSpec(cb.shape, lambda n: (0, 0))],
        out_specs=pl.BlockSpec((1, 1, num_classes), lambda n: (n, 0, 0)),
        compiler_params=_parallel_params(),
    )(x2, w, s, b, cw, cb)
    return out.reshape(N, num_classes)


# ----------------------------------------------------------------------------
# Parameter construction (deterministic, mirrors the PyTorch __init__)
# ----------------------------------------------------------------------------
def _make_divisible(ch, divisor=8, min_ch=None):
    if min_ch is None:
        min_ch = divisor
    new_ch = max(min_ch, int(ch + divisor / 2) // divisor * divisor)
    if new_ch < 0.9 * ch:
        new_ch += divisor
    return new_ch


def build_params(key, num_classes=1000, alpha=1.0, round_nearest=8):
    eps = 1e-5
    bn_scale = lambda c: jnp.full((1, c), 1.0 / math.sqrt(1.0 + eps), jnp.float32)
    bn_bias = lambda c: jnp.zeros((1, c), jnp.float32)

    keys = iter(jax.random.split(key, 128))

    def kaiming(shape, fan_out):
        return (jax.random.normal(next(keys), shape, jnp.float32)
                * math.sqrt(2.0 / fan_out))

    input_channel = _make_divisible(32 * alpha, round_nearest)
    last_channel = _make_divisible(1280 * alpha, round_nearest)

    # stem: 3x3, stride 2, 3 -> input_channel.  Weight stored as (9*3, Cout)
    # matching the (kh, kw, cin) im2col patch ordering used in stem_conv.
    stem = dict(w=kaiming((27, input_channel), fan_out=input_channel * 9),
                scale=bn_scale(input_channel), bias=bn_bias(input_channel))

    settings = [[1, 16, 1, 1], [6, 24, 2, 2], [6, 32, 3, 2], [6, 64, 4, 2],
                [6, 96, 3, 1], [6, 160, 3, 2], [6, 320, 1, 1]]
    blocks = []
    for t, c, n, s in settings:
        out_c = _make_divisible(c * alpha, round_nearest)
        for i in range(n):
            stride = s if i == 0 else 1
            hidden = input_channel * t
            expand = None
            if t != 1:
                expand = (kaiming((input_channel, hidden), hidden),
                          bn_scale(hidden), bn_bias(hidden))
            dwp = (kaiming((9, hidden), 9), bn_scale(hidden), bn_bias(hidden))
            project = (kaiming((hidden, out_c), out_c),
                       bn_scale(out_c), bn_bias(out_c))
            blocks.append(dict(expand=expand, dw=dwp, project=project,
                               stride=stride,
                               use_shortcut=(stride == 1
                                             and input_channel == out_c)))
            input_channel = out_c

    head = dict(
        w=kaiming((input_channel, last_channel), last_channel),
        scale=bn_scale(last_channel), bias=bn_bias(last_channel),
        cw=jax.random.normal(next(keys), (last_channel, num_classes),
                             jnp.float32) * 0.01,
        cb=jnp.zeros((1, num_classes), jnp.float32))

    return dict(stem=stem, blocks=blocks, head=head)


# ----------------------------------------------------------------------------
# Forward pass
# ----------------------------------------------------------------------------
def mobilenet_v2_forward(params, x_nchw):
    # layout: x_nchw is [N, 3, H, W] (PyTorch NCHW); compute runs in NHWC with
    # activations carried between fused block kernels as (N, H*W, C).
    x = jnp.transpose(x_nchw, (0, 2, 3, 1)).astype(jnp.float32)
    x, H, W = stem_conv(x, params["stem"])
    for p in params["blocks"]:
        x, H, W = inverted_residual(x, H, W, p)
    return head_forward(x, params["head"])


# ----------------------------------------------------------------------------
if __name__ == "__main__":
    key = jax.random.PRNGKey(0)
    pkey, xkey = jax.random.split(key)

    params = build_params(pkey, num_classes=1000, alpha=1.0)
    # Small input consistent with the module: batch=2, RGB, 32x32 spatial
    # (32 is the smallest size that survives the five stride-2 stages cleanly).
    x = jax.random.normal(xkey, (2, 3, 32, 32), jnp.float32)

    logits = mobilenet_v2_forward(params, x)
    jax.block_until_ready(logits)
    assert logits.shape == (2, 1000), logits.shape
    assert bool(jnp.all(jnp.isfinite(logits)))
    print("KERNEL_OK")
</pallas_src>

<mosaic_0001>
module attributes {stable_mosaic.version = 11 : i64} {
  func.func @_mm_bn_relu6_kernel(%arg0: i32, %arg1: memref<1x256x27xf32, #tpu.memory_space<vmem>>, %arg2: memref<27x32xf32, #tpu.memory_space<vmem>>, %arg3: memref<1x32xf32, #tpu.memory_space<vmem>>, %arg4: memref<1x32xf32, #tpu.memory_space<vmem>>, %arg5: memref<1x256x32xf32, #tpu.memory_space<vmem>>) attributes {dimension_semantics = [#tpu.dimension_semantics<parallel>], iteration_bounds = array<i64: 2>, scalar_prefetch = 0 : i64, scratch_operands = 0 : i64, tpu.core_type = #tpu.core_type<tc>, window_params = [{transform_indices = @transform_0, window_bounds = array<i64: 1, 256, 27>}, {pipeline_mode = #tpu.pipeline_mode<synchronous>, transform_indices = @transform_1, window_bounds = array<i64: 27, 32>}, {pipeline_mode = #tpu.pipeline_mode<synchronous>, transform_indices = @transform_2, window_bounds = array<i64: 1, 32>}, {pipeline_mode = #tpu.pipeline_mode<synchronous>, transform_indices = @transform_3, window_bounds = array<i64: 1, 32>}, {transform_indices = @transform_4, window_bounds = array<i64: 1, 256, 32>}]} {
    %c0 = arith.constant 0 : index
    %c0_0 = arith.constant 0 : index
    %c0_1 = arith.constant 0 : index
    %0 = vector.load %arg1[%c0, %c0_0, %c0_1] : memref<1x256x27xf32, #tpu.memory_space<vmem>>, vector<1x256x27xf32>
    %1 = vector.shape_cast %0 : vector<1x256x27xf32> to vector<256x27xf32>
    %c0_2 = arith.constant 0 : index
    %c0_3 = arith.constant 0 : index
    %2 = vector.load %arg2[%c0_2, %c0_3] : memref<27x32xf32, #tpu.memory_space<vmem>>, vector<27x32xf32>
    %cst = arith.constant dense<0.000000e+00> : vector<256x32xf32>
    %3 = tpu.matmul %1, %2, %cst {dimension_numbers = #tpu.dot_dimension_numbers<[1], [0], [0], [1], [0, 0, 1, 1], [], []>} : vector<256x27xf32>, vector<27x32xf32>, vector<256x32xf32> -> vector<256x32xf32>
    %c0_4 = arith.constant 0 : index
    %c0_5 = arith.constant 0 : index
    %4 = vector.load %arg3[%c0_4, %c0_5] : memref<1x32xf32, #tpu.memory_space<vmem>>, vector<1x32xf32>
    %5 = vector.broadcast %4 : vector<1x32xf32> to vector<256x32xf32>
    %6 = arith.mulf %3, %5 : vector<256x32xf32>
    %c0_6 = arith.constant 0 : index
    %c0_7 = arith.constant 0 : index
    %7 = vector.load %arg4[%c0_6, %c0_7] : memref<1x32xf32, #tpu.memory_space<vmem>>, vector<1x32xf32>
    %8 = vector.broadcast %7 : vector<1x32xf32> to vector<256x32xf32>
    %9 = arith.addf %6, %8 : vector<256x32xf32>
    %cst_8 = arith.constant 0.000000e+00 : f32
    %cst_9 = arith.constant 6.000000e+00 : f32
    %10 = vector.broadcast %cst_8 : f32 to vector<256x32xf32>
    %11 = arith.maximumf %10, %9 : vector<256x32xf32>
    %12 = vector.broadcast %cst_9 : f32 to vector<256x32xf32>
    %13 = arith.minimumf %12, %11 : vector<256x32xf32>
    %c0_10 = arith.constant 0 : index
    %c0_11 = arith.constant 0 : index
    %c0_12 = arith.constant 0 : index
    %14 = vector.load %arg5[%c0_10, %c0_11, %c0_12] : memref<1x256x32xf32, #tpu.memory_space<vmem>>, vector<1x256x32xf32>
    %15 = vector.shape_cast %14 : vector<1x256x32xf32> to vector<256x32xf32>
    %16 = vector.shape_cast %13 : vector<256x32xf32> to vector<1x256x32xf32>
    tpu.vector_store %arg5[%c0_10, %c0_11, %c0_12], %16 {strides = array<i32>} : memref<1x256x32xf32, #tpu.memory_space<vmem>>, vector<1x256x32xf32>,
    return
  }
  func.func @transform_0(%arg0: i32) -> (i32, i32, i32) {
    %c0_i32 = arith.constant 0 : i32
    %c0_i32_0 = arith.constant 0 : i32
    %c0_i32_1 = arith.constant 0 : i32
    return %arg0, %c0_i32, %c0_i32_0 : i32, i32, i32
  }
  func.func @transform_1(%arg0: i32) -> (i32, i32) {
    %c0_i32 = arith.constant 0 : i32
    %c0_i32_0 = arith.constant 0 : i32
    %c0_i32_1 = arith.constant 0 : i32
    return %c0_i32, %c0_i32_0 : i32, i32
  }
  func.func @transform_2(%arg0: i32) -> (i32, i32) {
    %c0_i32 = arith.constant 0 : i32
    %c0_i32_0 = arith.constant 0 : i32
    %c0_i32_1 = arith.constant 0 : i32
    return %c0_i32, %c0_i32_0 : i32, i32
  }
  func.func @transform_3(%arg0: i32) -> (i32, i32) {
    %c0_i32 = arith.constant 0 : i32
    %c0_i32_0 = arith.constant 0 : i32
    %c0_i32_1 = arith.constant 0 : i32
    return %c0_i32, %c0_i32_0 : i32, i32
  }
  func.func @transform_4(%arg0: i32) -> (i32, i32, i32) {
    %c0_i32 = arith.constant 0 : i32
    %c0_i32_0 = arith.constant 0 : i32
    %c0_i32_1 = arith.constant 0 : i32
    return %arg0, %c0_i32, %c0_i32_0 : i32, i32, i32
  }
}

</mosaic_0001>

<llo_original>
// kernel: tpu_custom_call.1
$region0: #{tpu_custom_call.1}
  #allocation0 [shape = 'u32[]', space=smem, size = 0x4, offset = 0x4, fixed_abs, tag = 'smem constant byte address 0x4 - core index']
  #allocation1 [shape = 'u32[72,128]{1,0:T(1,128)}', space=vmem, size = 0x9000, scoped, tag = 'internal scratch']
  %s0 = inlined_call_operand.vmem [shape: f32[2,256,27], index: 0, kind: input, shape index: {}]
  %s1 = inlined_call_operand.vmem [shape: f32[27,32], index: 1, kind: input, shape index: {}]
  %s2 = inlined_call_operand.vmem [shape: f32[1,32], index: 2, kind: input, shape index: {}]
  %s3 = inlined_call_operand.vmem [shape: f32[1,32], index: 3, kind: input, shape index: {}]
  %s4 = inlined_call_operand.vmem [shape: f32[2,256,32], index: 4, kind: output, shape index: {}]
  %s5 = sld [smem:[#allocation0]]
  $region49: #{tpu_custom_call.1} parent=0
    _
  %s7 = ssub.s32 1, %s5
  %s8 = scalar_select 0, %s7, %s5
  loop: start=0, step=1, limit=4
  $region2: #{tpu_custom_call.1} parent=0 // loop_pre_header
    _
  $region3: #{tpu_custom_call.1} parent=0 // loop_header
    %s10 = sphi 0, %s14
    %p11 = scmp.ge.s32.totalorder %s10, 4
    %s20 = sphi 0, %s22
    %s23 = sphi 0, %s20
    %s24 = sphi 0, %s23
    %s40 = sphi 0, %s24
    %s44 = sphi 0, %s44
    %s46 = sphi 0, %s44
    %s47 = sphi 0, %s46
    %s61 = sphi 0, %s47
    %s65 = sphi 0, %s65
    %s67 = sphi 0, %s65
    %s68 = sphi 0, %s67
    %s82 = sphi 0, %s68
    %s86 = sphi 0, %s86
    %s88 = sphi 0, %s86
    %s89 = sphi 0, %s88
    %s103 = sphi 0, %s89
    %s109 = sphi 0, %s111
    %s112 = sphi 0, %s109
    %s113 = sphi 0, %s112
    %s129 = sphi 0, %s113
  $region4: #{tpu_custom_call.1} parent=0 // loop_header_branch
    %13 = sbr.rel (%p11) target = $region8
  $region5: #{tpu_custom_call.1} parent=0 // loop_body
    %s15 = ssub.s32 %s10, 1
    %s16 = ssub.s32 %s10, 2
    %s17 = sadd.s32 %s10, 1
    %s18 = ssub.s32 %s10, %s17
    %p19 = scmp.eq.s32.totalorder %s18, 0
    %s21 = sadd.s32 %s20, 1
    %s22 = scalar_select %p19, %s20, %s21
    %p25 = pneg %p19
    %p26 = scmp.eq.s32.totalorder %s10, 1
    %p27 = por %p25, %p26
    %p28 = scmp.ne.s32.totalorder %s20, %s23
    %p29 = scmp.eq.s32.totalorder %s10, 0
    %p30 = por %p28, %p29
    %p31 = scmp.ne.s32.totalorder %s20, %s23
    %p32 = scmp.eq.s32.totalorder %s15, 1
    %p33 = por %p31, %p32
    %p34 = scmp.ne.s32.totalorder %s23, %s24
    %p35 = scmp.eq.s32.totalorder %s15, 0
    %p36 = por %p34, %p35
    %p37 = scmp.ne.s32.totalorder %s23, %s24
    %p38 = scmp.eq.s32.totalorder %s16, 1
    %p39 = por %p37, %p38
    %p41 = scmp.ne.s32.totalorder %s24, %s40
    %p42 = scmp.eq.s32.totalorder %s16, 0
    %p43 = por %p41, %p42
    %s45 = sadd.s32 %s44, 1
    %p48 = scmp.eq.s32.totalorder %s10, 1
    %p49 = scmp.ne.s32.totalorder %s44, %s46
    %p50 = scmp.eq.s32.totalorder %s10, 0
    %p51 = por %p49, %p50
    %p52 = scmp.ne.s32.totalorder %s44, %s46
    %p53 = scmp.eq.s32.totalorder %s15, 1
    %p54 = por %p52, %p53
    %p55 = scmp.ne.s32.totalorder %s46, %s47
    %p56 = scmp.eq.s32.totalorder %s15, 0
    %p57 = por %p55, %p56
    %p58 = scmp.ne.s32.totalorder %s46, %s47
    %p59 = scmp.eq.s32.totalorder %s16, 1
    %p60 = por %p58, %p59
    %p62 = scmp.ne.s32.totalorder %s47, %s61
    %p63 = scmp.eq.s32.totalorder %s16, 0
    %p64 = por %p62, %p63
    %s66 = sadd.s32 %s65, 1
    %p69 = scmp.eq.s32.totalorder %s10, 1
    %p70 = scmp.ne.s32.totalorder %s65, %s67
    %p71 = scmp.eq.s32.totalorder %s10, 0
    %p72 = por %p70, %p71
    %p73 = scmp.ne.s32.totalorder %s65, %s67
    %p74 = scmp.eq.s32.totalorder %s15, 1
    %p75 = por %p73, %p74
    %p76 = scmp.ne.s32.totalorder %s67, %s68
    %p77 = scmp.eq.s32.totalorder %s15, 0
    %p78 = por %p76, %p77
    %p79 = scmp.ne.s32.totalorder %s67, %s68
    %p80 = scmp.eq.s32.totalorder %s16, 1
    %p81 = por %p79, %p80
    %p83 = scmp.ne.s32.totalorder %s68, %s82
    %p84 = scmp.eq.s32.totalorder %s16, 0
    %p85 = por %p83, %p84
    %s87 = sadd.s32 %s86, 1
    %p90 = scmp.eq.s32.totalorder %s10, 1
    %p91 = scmp.ne.s32.totalorder %s86, %s88
    %p92 = scmp.eq.s32.totalorder %s10, 0
    %p93 = por %p91, %p92
    %p94 = scmp.ne.s32.totalorder %s86, %s88
    %p95 = scmp.eq.s32.totalorder %s15, 1
    %p96 = por %p94, %p95
    %p97 = scmp.ne.s32.totalorder %s88, %s89
    %p98 = scmp.eq.s32.totalorder %s15, 0
    %p99 = por %p97, %p98
    %p100 = scmp.ne.s32.totalorder %s88, %s89
    %p101 = scmp.eq.s32.totalorder %s16, 1
    %p102 = por %p100, %p101
    %p104 = scmp.ne.s32.totalorder %s89, %s103
    %p105 = scmp.eq.s32.totalorder %s16, 0
    %p106 = por %p104, %p105
    %s107 = ssub.s32 %s10, %s17
    %p108 = scmp.eq.s32.totalorder %s107, 0
    %s110 = sadd.s32 %s109, 1
    %s111 = scalar_select %p108, %s109, %s110
    %p114 = pneg %p108
    %p115 = scmp.eq.s32.totalorder %s10, 1
    %p116 = por %p114, %p115
    %p117 = scmp.ne.s32.totalorder %s109, %s112
    %p118 = scmp.eq.s32.totalorder %s10, 0
    %p119 = por %p117, %p118
    %p120 = scmp.ne.s32.totalorder %s109, %s112
    %p121 = scmp.eq.s32.totalorder %s15, 1
    %p122 = por %p120, %p121
    %p123 = scmp.ne.s32.totalorder %s112, %s113
    %p124 = scmp.eq.s32.totalorder %s15, 0
    %p125 = por %p123, %p124
    %p126 = scmp.ne.s32.totalorder %s112, %s113
    %p127 = scmp.eq.s32.totalorder %s16, 1
    %p128 = por %p126, %p127
    %p130 = scmp.ne.s32.totalorder %s113, %s129
    %p131 = scmp.eq.s32.totalorder %s16, 0
    %p132 = por %p130, %p131
    %p133 = scmp.le.s32.totalorder 1, %s10
    %p134 = scmp.lt.s32.totalorder %s10, 3
    %p135 = pnand %p133, %p134
    %p136 = pneg %p135
    // Predicated region
    $region9: #{tpu_custom_call.1} parent=5 // pred_check
      _
    $region10: #{tpu_custom_call.1} parent=5 // pred_check_branch
      %138 = sbr.rel (%p135) target = $region12
    $region11: #{tpu_custom_call.1} parent=5 // pred_region
      %s139 = ssub.s32 %s10, 1
      // Predicated region
      $region13: #{tpu_custom_call.1} parent=11 // pred_check
        %p140 = pneg %p57
      $region14: #{tpu_custom_call.1} parent=11 // pred_check_branch
        %142 = sbr.rel (%p140) target = $region16
      $region15: #{tpu_custom_call.1} parent=11 // pred_region
        _
      $region16: #{tpu_custom_call.1} parent=11 // pred_fallthru
        _
      // Predicated region
      $region17: #{tpu_custom_call.1} parent=11 // pred_check
        %p143 = pneg %p78
      $region18: #{tpu_custom_call.1} parent=11 // pred_check_branch
        %145 = sbr.rel (%p143) target = $region20
      $region19: #{tpu_custom_call.1} parent=11 // pred_region
        _
      $region20: #{tpu_custom_call.1} parent=11 // pred_fallthru
        _
      // Predicated region
      $region21: #{tpu_custom_call.1} parent=11 // pred_check
        %p146 = pneg %p99
      $region22: #{tpu_custom_call.1} parent=11 // pred_check_branch
        %148 = sbr.rel (%p146) target = $region24
      $region23: #{tpu_custom_call.1} parent=11 // pred_region
        _
      $region24: #{tpu_custom_call.1} parent=11 // pred_fallthru
        _
    $region12: #{tpu_custom_call.1} parent=5 // pred_fallthru
      _
    %p149 = scmp.lt.s32.totalorder %s10, 2
    // Predicated region
    $region25: #{tpu_custom_call.1} parent=5 // pred_check
      %p150 = pneg %p149
    $region26: #{tpu_custom_call.1} parent=5 // pred_check_branch
      %152 = sbr.rel (%p150) target = $region28
    $region27: #{tpu_custom_call.1} parent=5 // pred_region
      // Predicated region
      $region29: #{tpu_custom_call.1} parent=27 // pred_check
        %p153 = pneg %p30
      $region30: #{tpu_custom_call.1} parent=27 // pred_check_branch
        %155 = sbr.rel (%p153) target = $region32
      $region31: #{tpu_custom_call.1} parent=27 // pred_region
        %p156 = scmp.lt.s32.totalorder %s10, 1
        %s157 = scalar_select %p156, %s10, 1
        %s158 = smul.addr %s157, 32
        %s159 = smul.addr %s158, 8
        %s160 = scalar_lea.vmem %s0, %s159
      $region32: #{tpu_custom_call.1} parent=27 // pred_fallthru
        _
    $region28: #{tpu_custom_call.1} parent=5 // pred_fallthru
      _
    %p161 = scmp.le.s32.totalorder 1, %s10
    %p162 = scmp.lt.s32.totalorder %s10, 3
    %p163 = pnand %p161, %p162
    %p164 = pneg %p163
    // Predicated region
    $region33: #{tpu_custom_call.1} parent=5 // pred_check
      _
    $region34: #{tpu_custom_call.1} parent=5 // pred_check_branch
      %166 = sbr.rel (%p163) target = $region36
    $region35: #{tpu_custom_call.1} parent=5 // pred_region
      %s167 = ssub.s32 %s10, 1
      %p168 = scmp.lt.s32.totalorder %s15, 1
      %s169 = scalar_select %p168, %s15, 1
      %s170 = smul.addr %s169, 32
      %s171 = smul.addr %s170, 8
      %s172 = scalar_lea.vmem %s0, %s171
      %p173 = pneg %p36
      %p174 = pneg %p33
      %p175 = pneg %p57
      %p176 = pneg %p54
      %p177 = pneg %p78
      %p178 = pneg %p75
      %p179 = pneg %p99
      %p180 = pneg %p96
      %p181 = pneg %p125
      %p182 = pneg %p122
      %p183 = scmp.lt.s32.totalorder %s15, 1
      %s184 = scalar_select %p183, %s15, 1
      %s185 = smul.addr %s184, 32
      %s186 = smul.addr %s185, 8
      %s187 = scalar_lea.vmem %s4, %s186
      %p188 = scmp.lt.s32.totalorder %s15, 1
      %s189 = scalar_select %p188, %s15, 1
      %s190 = smul.addr %s189, 32
      %s191 = smul.addr %s190, 8
      %s192 = scalar_lea.vmem %s0, %s191
      %p193 = scmp.lt.s32.totalorder %s15, 1
      %s194 = scalar_select %p193, %s15, 1
      %s195 = smul.addr %s194, 32
      %s196 = smul.addr %s195, 8
      %s197 = scalar_lea.vmem %s4, %s196
      %v198 = vld [vmem:[%s192] sm:$0xff]
      %v199 = vld [vmem:[%s192 + $0x8] sm:$0xff]
      %v200 = vld [vmem:[%s192 + $0x10] sm:$0xff]
      %v201 = vld [vmem:[%s192 + $0x18] sm:$0xff]
      %v202 = vld [vmem:[%s192 + $0x20] sm:$0xff]
      %v203 = vld [vmem:[%s192 + $0x28] sm:$0xff]
      %v204 = vld [vmem:[%s192 + $0x30] sm:$0xff]
      %v205 = vld [vmem:[%s192 + $0x38] sm:$0xff]
      %v206 = vld [vmem:[%s192 + $0x40] sm:$0xff]
      %v207 = vld [vmem:[%s192 + $0x48] sm:$0xff]
      %v208 = vld [vmem:[%s192 + $0x50] sm:$0xff]
      %v209 = vld [vmem:[%s192 + $0x58] sm:$0xff]
      %v210 = vld [vmem:[%s192 + $0x60] sm:$0xff]
      %v211 = vld [vmem:[%s192 + $0x68] sm:$0xff]
      %v212 = vld [vmem:[%s192 + $0x70] sm:$0xff]
      %v213 = vld [vmem:[%s192 + $0x78] sm:$0xff]
      %v214 = vld [vmem:[%s192 + $0x80] sm:$0xff]
      %v215 = vld [vmem:[%s192 + $0x88] sm:$0xff]
      %v216 = vld [vmem:[%s192 + $0x90] sm:$0xff]
      %v217 = vld [vmem:[%s192 + $0x98] sm:$0xff]
      %v218 = vld [vmem:[%s192 + $0xa0] sm:$0xff]
      %v219 = vld [vmem:[%s192 + $0xa8] sm:$0xff]
      %v220 = vld [vmem:[%s192 + $0xb0] sm:$0xff]
      %v221 = vld [vmem:[%s192 + $0xb8] sm:$0xff]
      %v222 = vld [vmem:[%s192 + $0xc0] sm:$0xff]
      %v223 = vld [vmem:[%s192 + $0xc8] sm:$0xff]
      %v224 = vld [vmem:[%s192 + $0xd0] sm:$0xff]
      %v225 = vld [vmem:[%s192 + $0xd8] sm:$0xff]
      %v226 = vld [vmem:[%s192 + $0xe0] sm:$0xff]
      %v227 = vld [vmem:[%s192 + $0xe8] sm:$0xff]
      %v228 = vld [vmem:[%s192 + $0xf0] sm:$0xff]
      %v229 = vld [vmem:[%s192 + $0xf8] sm:$0xff]
      %v230 = vld [vmem:[%s1] sm:$0xff]
      %v231 = vld [vmem:[%s1 + $0x8] sm:$0xff]
      %v232 = vld [vmem:[%s1 + $0x10] sm:$0xff]
      %v233 = vld [vmem:[%s1 + $0x18] sm:$0x7]
      %vm234 = vcmask 220160
      %v236 = vsel %vm234, %v198, 0
      %v239 = vsel %vm234, %v199, 0
      %v242 = vsel %vm234, %v200, 0
      %v245 = vsel %vm234, %v201, 0
      %v248 = vsel %vm234, %v202, 0
      %v251 = vsel %vm234, %v203, 0
      %v254 = vsel %vm234, %v204, 0
      %v257 = vsel %vm234, %v205, 0
      %v260 = vsel %vm234, %v206, 0
      %v263 = vsel %vm234, %v207, 0
      %v266 = vsel %vm234, %v208, 0
      %v269 = vsel %vm234, %v209, 0
      %v272 = vsel %vm234, %v210, 0
      %v275 = vsel %vm234, %v211, 0
      %v278 = vsel %vm234, %v212, 0
      %v281 = vsel %vm234, %v213, 0
      %v284 = vsel %vm234, %v214, 0
      %v287 = vsel %vm234, %v215, 0
      %v290 = vsel %vm234, %v216, 0
      %v293 = vsel %vm234, %v217, 0
      %v296 = vsel %vm234, %v218, 0
      %v299 = vsel %vm234, %v219, 0
      %v302 = vsel %vm234, %v220, 0
      %v305 = vsel %vm234, %v221, 0
      %v308 = vsel %vm234, %v222, 0
      %v311 = vsel %vm234, %v223, 0
      %v314 = vsel %vm234, %v224, 0
      %v317 = vsel %vm234, %v225, 0
      %v320 = vsel %vm234, %v226, 0
      %v323 = vsel %vm234, %v227, 0
      %v326 = vsel %vm234, %v228, 0
      %v329 = vsel %vm234, %v229, 0
      %vm331 = vcmask 1042432
      %v333 = vsel %vm331, %v233, 0
      %335 = vmatpush.msra.mxu0 0.0
      %336 = vmatpush.msra.mxu0 0.0
      %337 = vmatpush.msra.mxu0 0.0
      %338 = vmatpush.msra.mxu0 0.0
      %339 = vmatpush.msra.mxu0 0.0
      %340 = vmatpush.msra.mxu0 0.0
      %341 = vmatpush.msra.mxu0 0.0
      %342 = vmatpush.msra.mxu0 0.0
      %343 = vmatpush.msra.mxu0 0.0
      %344 = vmatpush.msra.mxu0 0.0
      %345 = vmatpush.msra.mxu0 0.0
      %346 = vmatpush.msra.mxu0 0.0
      %347 = vmatpush.msra.mxu0 %v333
      %348 = vmatpush.msra.mxu0 %v232
      %349 = vmatpush.msra.mxu0 %v231
      %350 = vmatpush.msra.mxu0 %v230
      %351 = vmatmul.f32.gmra.mxu0 %v236
      %v352 = vpop.f32.mrf.mxu0
      %v353 = vadd.f32 0.0, %v352
      %354 = vmatmul.f32.gmra.mxu0 %v239
      %v355 = vpop.f32.mrf.mxu0
      %v356 = vadd.f32 0.0, %v355
      %357 = vmatmul.f32.gmra.mxu0 %v242
      %v358 = vpop.f32.mrf.mxu0
      %v359 = vadd.f32 0.0, %v358
      %360 = vmatmul.f32.gmra.mxu0 %v245
      %v361 = vpop.f32.mrf.mxu0
      %v362 = vadd.f32 0.0, %v361
      %363 = vmatmul.f32.gmra.mxu0 %v248
      %v364 = vpop.f32.mrf.mxu0
      %v365 = vadd.f32 0.0, %v364
      %366 = vmatmul.f32.gmra.mxu0 %v251
      %v367 = vpop.f32.mrf.mxu0
      %v368 = vadd.f32 0.0, %v367
      %369 = vmatmul.f32.gmra.mxu0 %v254
      %v370 = vpop.f32.mrf.mxu0
      %v371 = vadd.f32 0.0, %v370
      %372 = vmatmul.f32.gmra.mxu0 %v257
      %v373 = vpop.f32.mrf.mxu0
      %v374 = vadd.f32 0.0, %v373
      %375 = vmatmul.f32.gmra.mxu0 %v260
      %v376 = vpop.f32.mrf.mxu0
      %v377 = vadd.f32 0.0, %v376
      %378 = vmatmul.f32.gmra.mxu0 %v263
      %v379 = vpop.f32.mrf.mxu0
      %v380 = vadd.f32 0.0, %v379
      %381 = vmatmul.f32.gmra.mxu0 %v266
      %v382 = vpop.f32.mrf.mxu0
      %v383 = vadd.f32 0.0, %v382
      %384 = vmatmul.f32.gmra.mxu0 %v269
      %v385 = vpop.f32.mrf.mxu0
      %v386 = vadd.f32 0.0, %v385
      %387 = vmatmul.f32.gmra.mxu0 %v272
      %v388 = vpop.f32.mrf.mxu0
      %v389 = vadd.f32 0.0, %v388
      %390 = vmatmul.f32.gmra.mxu0 %v275
      %v391 = vpop.f32.mrf.mxu0
      %v392 = vadd.f32 0.0, %v391
      %393 = vmatmul.f32.gmra.mxu0 %v278
      %v394 = vpop.f32.mrf.mxu0
      %v395 = vadd.f32 0.0, %v394
      %396 = vmatmul.f32.gmra.mxu0 %v281
      %v397 = vpop.f32.mrf.mxu0
      %v398 = vadd.f32 0.0, %v397
      %399 = vmatmul.f32.gmra.mxu0 %v284
      %v400 = vpop.f32.mrf.mxu0
      %v401 = vadd.f32 0.0, %v400
      %402 = vmatmul.f32.gmra.mxu0 %v287
      %v403 = vpop.f32.mrf.mxu0
      %v404 = vadd.f32 0.0, %v403
      %405 = vmatmul.f32.gmra.mxu0 %v290
      %v406 = vpop.f32.mrf.mxu0
      %v407 = vadd.f32 0.0, %v406
      %408 = vmatmul.f32.gmra.mxu0 %v293
      %v409 = vpop.f32.mrf.mxu0
      %v410 = vadd.f32 0.0, %v409
      %411 = vmatmul.f32.gmra.mxu0 %v296
      %v412 = vpop.f32.mrf.mxu0
      %v413 = vadd.f32 0.0, %v412
      %414 = vmatmul.f32.gmra.mxu0 %v299
      %v415 = vpop.f32.mrf.mxu0
      %v416 = vadd.f32 0.0, %v415
      %417 = vmatmul.f32.gmra.mxu0 %v302
      %v418 = vpop.f32.mrf.mxu0
      %v419 = vadd.f32 0.0, %v418
      %420 = vmatmul.f32.gmra.mxu0 %v305
      %v421 = vpop.f32.mrf.mxu0
      %v422 = vadd.f32 0.0, %v421
      %423 = vmatmul.f32.gmra.mxu0 %v308
      %v424 = vpop.f32.mrf.mxu0
      %v425 = vadd.f32 0.0, %v424
      %426 = vmatmul.f32.gmra.mxu0 %v311
      %v427 = vpop.f32.mrf.mxu0
      %v428 = vadd.f32 0.0, %v427
      %429 = vmatmul.f32.gmra.mxu0 %v314
      %v430 = vpop.f32.mrf.mxu0
      %v431 = vadd.f32 0.0, %v430
      %432 = vmatmul.f32.gmra.mxu0 %v317
      %v433 = vpop.f32.mrf.mxu0
      %v434 = vadd.f32 0.0, %v433
      %435 = vmatmul.f32.gmra.mxu0 %v320
      %v436 = vpop.f32.mrf.mxu0
      %v437 = vadd.f32 0.0, %v436
      %438 = vmatmul.f32.gmra.mxu0 %v323
      %v439 = vpop.f32.mrf.mxu0
      %v440 = vadd.f32 0.0, %v439
      %441 = vmatmul.f32.gmra.mxu0 %v326
      %v442 = vpop.f32.mrf.mxu0
      %v443 = vadd.f32 0.0, %v442
      %444 = vmatmul.f32.gmra.mxu0 %v329
      %v445 = vpop.f32.mrf.mxu0
      %v446 = vadd.f32 0.0, %v445
      %447 = vdwg.mxu0
      %v448 = vld [vmem:[%s2] sm:$0x1]
      %v450 = vperm.slane %v448, 0
      %v452 = vmul.f32 %v353, %v450
      %v453 = vmul.f32 %v356, %v450
      %v454 = vmul.f32 %v359, %v450
      %v455 = vmul.f32 %v362, %v450
      %v456 = vmul.f32 %v365, %v450
      %v457 = vmul.f32 %v368, %v450
      %v458 = vmul.f32 %v371, %v450
      %v459 = vmul.f32 %v374, %v450
      %v460 = vmul.f32 %v377, %v450
      %v461 = vmul.f32 %v380, %v450
      %v462 = vmul.f32 %v383, %v450
      %v463 = vmul.f32 %v386, %v450
      %v464 = vmul.f32 %v389, %v450
      %v465 = vmul.f32 %v392, %v450
      %v466 = vmul.f32 %v395, %v450
      %v467 = vmul.f32 %v398, %v450
      %v468 = vmul.f32 %v401, %v450
      %v469 = vmul.f32 %v404, %v450
      %v470 = vmul.f32 %v407, %v450
      %v471 = vmul.f32 %v410, %v450
      %v472 = vmul.f32 %v413, %v450
      %v473 = vmul.f32 %v416, %v450
      %v474 = vmul.f32 %v419, %v450
      %v475 = vmul.f32 %v422, %v450
      %v476 = vmul.f32 %v425, %v450
      %v477 = vmul.f32 %v428, %v450
      %v478 = vmul.f32 %v431, %v450
      %v479 = vmul.f32 %v434, %v450
      %v480 = vmul.f32 %v437, %v450
      %v481 = vmul.f32 %v440, %v450
      %v482 = vmul.f32 %v443, %v450
      %v483 = vmul.f32 %v446, %v450
      %v484 = vld [vmem:[%s3] sm:$0x1]
      %v486 = vperm.slane %v484, 0
      %v488 = vadd.f32 %v452, %v486
      %v489 = vadd.f32 %v453, %v486
      %v490 = vadd.f32 %v454, %v486
      %v491 = vadd.f32 %v455, %v486
      %v492 = vadd.f32 %v456, %v486
      %v493 = vadd.f32 %v457, %v486
      %v494 = vadd.f32 %v458, %v486
      %v495 = vadd.f32 %v459, %v486
      %v496 = vadd.f32 %v460, %v486
      %v497 = vadd.f32 %v461, %v486
      %v498 = vadd.f32 %v462, %v486
      %v499 = vadd.f32 %v463, %v486
      %v500 = vadd.f32 %v464, %v486
      %v501 = vadd.f32 %v465, %v486
      %v502 = vadd.f32 %v466, %v486
      %v503 = vadd.f32 %v467, %v486
      %v504 = vadd.f32 %v468, %v486
      %v505 = vadd.f32 %v469, %v486
      %v506 = vadd.f32 %v470, %v486
      %v507 = vadd.f32 %v471, %v486
      %v508 = vadd.f32 %v472, %v486
      %v509 = vadd.f32 %v473, %v486
      %v510 = vadd.f32 %v474, %v486
      %v511 = vadd.f32 %v475, %v486
      %v512 = vadd.f32 %v476, %v486
      %v513 = vadd.f32 %v477, %v486
      %v514 = vadd.f32 %v478, %v486
      %v515 = vadd.f32 %v479, %v486
      %v516 = vadd.f32 %v480, %v486
      %v517 = vadd.f32 %v481, %v486
      %v518 = vadd.f32 %v482, %v486
      %v519 = vadd.f32 %v483, %v486
      %v520 = vmax.f32 %v488, 0.0
      %v521 = vmax.f32 %v489, 0.0
      %v522 = vmax.f32 %v490, 0.0
      %v523 = vmax.f32 %v491, 0.0
      %v524 = vmax.f32 %v492, 0.0
      %v525 = vmax.f32 %v493, 0.0
      %v526 = vmax.f32 %v494, 0.0
      %v527 = vmax.f32 %v495, 0.0
      %v528 = vmax.f32 %v496, 0.0
      %v529 = vmax.f32 %v497, 0.0
      %v530 = vmax.f32 %v498, 0.0
      %v531 = vmax.f32 %v499, 0.0
      %v532 = vmax.f32 %v500, 0.0
      %v533 = vmax.f32 %v501, 0.0
      %v534 = vmax.f32 %v502, 0.0
      %v535 = vmax.f32 %v503, 0.0
      %v536 = vmax.f32 %v504, 0.0
      %v537 = vmax.f32 %v505, 0.0
      %v538 = vmax.f32 %v506, 0.0
      %v539 = vmax.f32 %v507, 0.0
      %v540 = vmax.f32 %v508, 0.0
      %v541 = vmax.f32 %v509, 0.0
      %v542 = vmax.f32 %v510, 0.0
      %v543 = vmax.f32 %v511, 0.0
      %v544 = vmax.f32 %v512, 0.0
      %v545 = vmax.f32 %v513, 0.0
      %v546 = vmax.f32 %v514, 0.0
      %v547 = vmax.f32 %v515, 0.0
      %v548 = vmax.f32 %v516, 0.0
      %v549 = vmax.f32 %v517, 0.0
      %v550 = vmax.f32 %v518, 0.0
      %v551 = vmax.f32 %v519, 0.0
      %v552 = vmin.f32 %v520, 6.0
      %v553 = vmin.f32 %v521, 6.0
      %v554 = vmin.f32 %v522, 6.0
      %v555 = vmin.f32 %v523, 6.0
      %v556 = vmin.f32 %v524, 6.0
      %v557 = vmin.f32 %v525, 6.0
      %v558 = vmin.f32 %v526, 6.0
      %v559 = vmin.f32 %v527, 6.0
      %v560 = vmin.f32 %v528, 6.0
      %v561 = vmin.f32 %v529, 6.0
      %v562 = vmin.f32 %v530, 6.0
      %v563 = vmin.f32 %v531, 6.0
      %v564 = vmin.f32 %v532, 6.0
      %v565 = vmin.f32 %v533, 6.0
      %v566 = vmin.f32 %v534, 6.0
      %v567 = vmin.f32 %v535, 6.0
      %v568 = vmin.f32 %v536, 6.0
      %v569 = vmin.f32 %v537, 6.0
      %v570 = vmin.f32 %v538, 6.0
      %v571 = vmin.f32 %v539, 6.0
      %v572 = vmin.f32 %v540, 6.0
      %v573 = vmin.f32 %v541, 6.0
      %v574 = vmin.f32 %v542, 6.0
      %v575 = vmin.f32 %v543, 6.0
      %v576 = vmin.f32 %v544, 6.0
      %v577 = vmin.f32 %v545, 6.0
      %v578 = vmin.f32 %v546, 6.0
      %v579 = vmin.f32 %v547, 6.0
      %v580 = vmin.f32 %v548, 6.0
      %v581 = vmin.f32 %v549, 6.0
      %v582 = vmin.f32 %v550, 6.0
      %v583 = vmin.f32 %v551, 6.0
      %vm584 = vcmask 261120
      %585 = vst.msk [vmem:[%s197] sm:$0xff] %vm584, %v552
      %586 = vst.msk [vmem:[%s197 + $0x8] sm:$0xff] %vm584, %v553
      %587 = vst.msk [vmem:[%s197 + $0x10] sm:$0xff] %vm584, %v554
      %588 = vst.msk [vmem:[%s197 + $0x18] sm:$0xff] %vm584, %v555
      %589 = vst.msk [vmem:[%s197 + $0x20] sm:$0xff] %vm584, %v556
      %590 = vst.msk [vmem:[%s197 + $0x28] sm:$0xff] %vm584, %v557
      %591 = vst.msk [vmem:[%s197 + $0x30] sm:$0xff] %vm584, %v558
      %592 = vst.msk [vmem:[%s197 + $0x38] sm:$0xff] %vm584, %v559
      %593 = vst.msk [vmem:[%s197 + $0x40] sm:$0xff] %vm584, %v560
      %594 = vst.msk [vmem:[%s197 + $0x48] sm:$0xff] %vm584, %v561
      %595 = vst.msk [vmem:[%s197 + $0x50] sm:$0xff] %vm584, %v562
      %596 = vst.msk [vmem:[%s197 + $0x58] sm:$0xff] %vm584, %v563
      %597 = vst.msk [vmem:[%s197 + $0x60] sm:$0xff] %vm584, %v564
      %598 = vst.msk [vmem:[%s197 + $0x68] sm:$0xff] %vm584, %v565
      %599 = vst.msk [vmem:[%s197 + $0x70] sm:$0xff] %vm584, %v566
      %600 = vst.msk [vmem:[%s197 + $0x78] sm:$0xff] %vm584, %v567
      %601 = vst.msk [vmem:[%s197 + $0x80] sm:$0xff] %vm584, %v568
      %602 = vst.msk [vmem:[%s197 + $0x88] sm:$0xff] %vm584, %v569
      %603 = vst.msk [vmem:[%s197 + $0x90] sm:$0xff] %vm584, %v570
      %604 = vst.msk [vmem:[%s197 + $0x98] sm:$0xff] %vm584, %v571
      %605 = vst.msk [vmem:[%s197 + $0xa0] sm:$0xff] %vm584, %v572
      %606 = vst.msk [vmem:[%s197 + $0xa8] sm:$0xff] %vm584, %v573
      %607 = vst.msk [vmem:[%s197 + $0xb0] sm:$0xff] %vm584, %v574
      %608 = vst.msk [vmem:[%s197 + $0xb8] sm:$0xff] %vm584, %v575
      %609 = vst.msk [vmem:[%s197 + $0xc0] sm:$0xff] %vm584, %v576
      %610 = vst.msk [vmem:[%s197 + $0xc8] sm:$0xff] %vm584, %v577
      %611 = vst.msk [vmem:[%s197 + $0xd0] sm:$0xff] %vm584, %v578
      %612 = vst.msk [vmem:[%s197 + $0xd8] sm:$0xff] %vm584, %v579
      %613 = vst.msk [vmem:[%s197 + $0xe0] sm:$0xff] %vm584, %v580
      %614 = vst.msk [vmem:[%s197 + $0xe8] sm:$0xff] %vm584, %v581
      %615 = vst.msk [vmem:[%s197 + $0xf0] sm:$0xff] %vm584, %v582
      %616 = vst.msk [vmem:[%s197 + $0xf8] sm:$0xff] %vm584, %v583
      %p617 = scmp.lt.s32.totalorder %s15, 1
      %s618 = scalar_select %p617, %s15, 1
      %s619 = smul.addr %s618, 32
      %s620 = smul.addr %s619, 8
      %s621 = scalar_lea.vmem %s4, %s620
      // Predicated region
      $region37: #{tpu_custom_call.1} parent=35 // pred_check
        %p622 = pneg %p122
      $region38: #{tpu_custom_call.1} parent=35 // pred_check_branch
        %624 = sbr.rel (%p622) target = $region40
      $region39: #{tpu_custom_call.1} parent=35 // pred_region
        _
      $region40: #{tpu_custom_call.1} parent=35 // pred_fallthru
        _
    $region36: #{tpu_custom_call.1} parent=5 // pred_fallthru
      _
    %p625 = scmp.le.s32.totalorder 2, %s10
    // Predicated region
    $region41: #{tpu_custom_call.1} parent=5 // pred_check
      %p626 = pneg %p625
    $region42: #{tpu_custom_call.1} parent=5 // pred_check_branch
      %628 = sbr.rel (%p626) target = $region44
    $region43: #{tpu_custom_call.1} parent=5 // pred_region
      %s629 = ssub.s32 %s10, 2
      // Predicated region
      $region45: #{tpu_custom_call.1} parent=43 // pred_check
        %p630 = pneg %p128
      $region46: #{tpu_custom_call.1} parent=43 // pred_check_branch
        %632 = sbr.rel (%p630) target = $region48
      $region47: #{tpu_custom_call.1} parent=43 // pred_region
        %p633 = scmp.lt.s32.totalorder %s16, 1
        %s634 = scalar_select %p633, %s16, 1
        %s635 = smul.addr %s634, 32
        %s636 = smul.addr %s635, 8
        %s637 = scalar_lea.vmem %s4, %s636
      $region48: #{tpu_custom_call.1} parent=43 // pred_fallthru
        _
    $region44: #{tpu_custom_call.1} parent=5 // pred_fallthru
      _
  $region6: #{tpu_custom_call.1} parent=0 // loop_footer
    %s14 = sadd.s32 1, %s10
  $region7: #{tpu_custom_call.1} parent=0 // loop_footer_branch
    %9 = sbr.rel target = $region3
  $region8: #{tpu_custom_call.1} parent=0 // loop_exit
    _

</llo_original>
